<compile_context>
chip_gen: v5e
topology: v5e:2x2
jax: 0.10.0
libtpu: 0.0.40
codegen_flags: <defaults>
</compile_context>

<pallas_src>
import functools

import jax
import jax.numpy as jnp
from jax.experimental import pallas as pl
from jax.experimental.pallas import tpu as pltpu


def _round_up(n, m):
    return ((n + m - 1) // m) * m


# ---------------------------------------------------------------------------
# Kernel
# ---------------------------------------------------------------------------
def actor_critic_kernel(x_ref, w1_ref, b1_ref, w2_ref, b2_ref, out_ref, *,
                        action_dim):
    x = x_ref[...]                                                # (TB, D)

    # Fused first layer: [actor_h | critic_h] = relu(x @ W1 + b1)
    h = jnp.dot(x, w1_ref[...], preferred_element_type=jnp.float32) + b1_ref[...]
    h = jnp.maximum(h, 0.0)                                       # (TB, 2H_pad)
    h = h.astype(w2_ref.dtype)                                    # no-op in f32 path

    # Fused block-diagonal second layer: slab = [logits | value | 0...]
    slab = jnp.dot(h, w2_ref[...], preferred_element_type=jnp.float32) + b2_ref[...]

    # Softmax restricted to the first `action_dim` lanes (padded lanes masked).
    lane = jax.lax.broadcasted_iota(jnp.int32, slab.shape, dimension=1)
    is_logit = lane < action_dim
    logits = jnp.where(is_logit, slab, jnp.float32(-1e30))
    m = jnp.max(logits, axis=-1, keepdims=True)
    e = jnp.where(is_logit, jnp.exp(logits - m), 0.0)
    s = jnp.sum(e, axis=-1, keepdims=True)
    probs = e * pl.reciprocal(s, approx=False)

    # One unmasked lane-dense 128-wide store: probs in [:A], value at lane A,
    # zeros elsewhere (relies on W2/b2 padded columns being exactly zero).
    out_ref[...] = jnp.where(is_logit, probs, slab).astype(out_ref.dtype)


# ---------------------------------------------------------------------------
# Wrapper
# ---------------------------------------------------------------------------
def actor_critic_forward(x, packed, action_dim, *, tile_b=None,
                         return_slab=False):
    """x: (B, input_dim). packed: dict from pack_params().

    Returns (probs[B, A], value[B, 1]) or, if return_slab, the raw
    (B_pad, 128) slab for downstream fusion (lanes [:A]=probs, [A]=value).
    """
    w1, b1, w2, b2 = packed["w1"], packed["b1"], packed["w2"], packed["b2"]
    B, D = x.shape
    assert w1.shape[0] == D, "packed W1 must have in_features == input_dim"
    H2_pad = w1.shape[1]
    OUT_pad = w2.shape[1]

    B8 = _round_up(max(B, 1), 8)
    if tile_b is None:
        # Aim for >=2 grid steps (v7x megacore sharding) once B > 8 while
        # capping the block so double-buffered x+out stays a few MiB.
        # NOTE: on v5e, sweeping tile_b up to 2048-4096 amortizes DMA setup
        # better; vmem_limit_bytes below already covers that.
        max_tile = 1024
        n_steps = max(2, pl.cdiv(B8, max_tile))
        tile_b = max(8, min(max_tile, _round_up(pl.cdiv(B8, n_steps), 8)))
    grid_b = pl.cdiv(B8, tile_b)
    B_pad = grid_b * tile_b                                # waste <= a few rows

    x_in = x.astype(w1.dtype)
    if B_pad != B:
        # Tiny (<= ~2*tile rounding) zero pad keeps tail-block rows defined
        # (no NaN/inf in discarded rows); skipped entirely when not needed.
        x_in = jnp.pad(x_in, ((0, B_pad - B), (0, 0)))

    out_dtype = jnp.float32  # TODO(synk): bf16 slab halves writeback if 1e-5
                             # tolerance can be relaxed for deployment.

    itemsize = lambda a: a.size * jnp.dtype(a.dtype).itemsize
    vmem_bytes = (2 * tile_b * (D * jnp.dtype(x_in.dtype).itemsize
                                + OUT_pad * jnp.dtype(out_dtype).itemsize)
                  + 2 * (itemsize(w1) + itemsize(b1) + itemsize(w2) + itemsize(b2))
                  + (4 << 20))
    vmem_limit = int(min(max(vmem_bytes, 16 << 20), 64 << 20))

    kernel = functools.partial(actor_critic_kernel, action_dim=action_dim)

    out = pl.pallas_call(
        kernel,
        out_shape=jax.ShapeDtypeStruct((B_pad, OUT_pad), out_dtype),
        grid=(grid_b,),
        in_specs=[
            pl.BlockSpec((tile_b, D), lambda i: (i, 0)),         # x: pipelined
            pl.BlockSpec((D, H2_pad), lambda i: (0, 0)),         # W1: resident
            pl.BlockSpec((1, H2_pad), lambda i: (0, 0)),         # b1: resident
            pl.BlockSpec((H2_pad, OUT_pad), lambda i: (0, 0)),   # W2: resident
            pl.BlockSpec((1, OUT_pad), lambda i: (0, 0)),        # b2: resident
        ],
        out_specs=pl.BlockSpec((tile_b, OUT_pad), lambda i: (i, 0)),
        compiler_params=pltpu.CompilerParams(
            dimension_semantics=("parallel",),
            vmem_limit_bytes=vmem_limit),
        cost_estimate=pl.CostEstimate(
            flops=2 * B_pad * (D * H2_pad + H2_pad * OUT_pad),
            transcendentals=B_pad * OUT_pad,
            bytes_accessed=(itemsize(x_in) + itemsize(w1) + itemsize(b1)
                            + itemsize(w2) + itemsize(b2)
                            + B_pad * OUT_pad * jnp.dtype(out_dtype).itemsize),
        ),
    )(x_in, w1, b1, w2, b2)

    if return_slab:
        return out

    # Single narrow slice of the useful 9 lanes, then a cheap split.
    head = out[:B, :action_dim + 1]
    probs = head[:, :action_dim]
    value = head[:, action_dim:action_dim + 1]
    return probs, value


# ---------------------------------------------------------------------------
# Parameter construction
# ---------------------------------------------------------------------------
def init_params(key, input_dim, action_dim, hidden_dim):
    """Deterministic synthetic init (uniform, roughly matching nn.Linear scale).

    Weights stored as (in_features, out_features); biases as (1, out_features).
    """
    ks = jax.random.split(key, 8)

    def lin(kw, kb, fan_in, fan_out):
        bound = 1.0 / jnp.sqrt(fan_in)
        w = jax.random.uniform(kw, (fan_in, fan_out), jnp.float32, -bound, bound)
        b = jax.random.uniform(kb, (1, fan_out), jnp.float32, -bound, bound)
        return w, b

    wa1, ba1 = lin(ks[0], ks[1], input_dim, hidden_dim)
    wa2, ba2 = lin(ks[2], ks[3], hidden_dim, action_dim)
    wc1, bc1 = lin(ks[4], ks[5], input_dim, hidden_dim)
    wc2, bc2 = lin(ks[6], ks[7], hidden_dim, 1)
    return dict(wa1=wa1, ba1=ba1, wa2=wa2, ba2=ba2,
                wc1=wc1, bc1=bc1, wc2=wc2, bc2=bc2)


def pack_params(p, input_dim, action_dim, hidden_dim,
                compute_dtype=jnp.float32):
    """Fuse + pad actor/critic params into 2 weights + 2 biases.

    W1: (D, 2H_pad)      = [wa1 | wc1] columns, zero padded (no row padding).
    W2: (2H_pad, OUT_pad) block-diagonal: wa2 feeds logit lanes [0:A] from
        hidden rows [0:H]; wc2 feeds the value lane [A] from rows [H:2H].
        Off-diagonal / padded entries are exactly zero (the kernel's output
        masking relies on this; re-zero padding if weights are ever updated).

    compute_dtype=jnp.bfloat16 halves W/x DMA bytes and uses the bf16-native
    MXU path on v6e/v7x, but will NOT meet the 1e-5 f32 tolerance (~1e-3).
    """
    H2 = 2 * hidden_dim
    H2_pad = _round_up(H2, 128)
    OUT_pad = _round_up(action_dim + 1, 128)

    w1 = jnp.zeros((input_dim, H2_pad), jnp.float32)
    w1 = w1.at[:, :hidden_dim].set(p["wa1"])
    w1 = w1.at[:, hidden_dim:H2].set(p["wc1"])
    b1 = jnp.zeros((1, H2_pad), jnp.float32)
    b1 = b1.at[:, :hidden_dim].set(p["ba1"])
    b1 = b1.at[:, hidden_dim:H2].set(p["bc1"])

    w2 = jnp.zeros((H2_pad, OUT_pad), jnp.float32)
    w2 = w2.at[:hidden_dim, :action_dim].set(p["wa2"])
    w2 = w2.at[hidden_dim:H2, action_dim:action_dim + 1].set(p["wc2"])
    b2 = jnp.zeros((1, OUT_pad), jnp.float32)
    b2 = b2.at[:, :action_dim].set(p["ba2"])
    b2 = b2.at[:, action_dim:action_dim + 1].set(p["bc2"])

    return dict(w1=w1.astype(compute_dtype), b1=b1,
                w2=w2.astype(compute_dtype), b2=b2)


def reference_forward(x, p):
    h_a = jnp.maximum(x @ p["wa1"] + p["ba1"], 0.0)
    logits = h_a @ p["wa2"] + p["ba2"]
    probs = jax.nn.softmax(logits, axis=-1)
    h_c = jnp.maximum(x @ p["wc1"] + p["bc1"], 0.0)
    value = h_c @ p["wc2"] + p["bc2"]
    return probs, value


if __name__ == "__main__":
    input_dim, action_dim, hidden_dim = 16, 8, 32
    batch = 4

    key = jax.random.PRNGKey(0)
    k_x, k_p = jax.random.split(key)
    x = jax.random.normal(k_x, (batch, input_dim), jnp.float32)
    params = init_params(k_p, input_dim, action_dim, hidden_dim)
    packed = pack_params(params, input_dim, action_dim, hidden_dim)

    fwd = jax.jit(functools.partial(actor_critic_forward, action_dim=action_dim))
    probs, value = fwd(x, packed)
    jax.block_until_ready((probs, value))

    ref_probs, ref_value = reference_forward(x, params)
    assert probs.shape == (batch, action_dim)
    assert value.shape == (batch, 1)
    assert jnp.allclose(probs, ref_probs, atol=1e-5, rtol=1e-5)
    assert jnp.allclose(value, ref_value, atol=1e-5, rtol=1e-5)
    assert jnp.allclose(jnp.sum(probs, axis=-1), 1.0, atol=1e-5)

    print("KERNEL_OK")
</pallas_src>

<mosaic_0001>
module attributes {stable_mosaic.version = 11 : i64} {
  func.func @actor_critic_kernel(%arg0: i32, %arg1: memref<8x16xf32, #tpu.memory_space<vmem>>, %arg2: memref<16x128xf32, #tpu.memory_space<vmem>>, %arg3: memref<1x128xf32, #tpu.memory_space<vmem>>, %arg4: memref<128x128xf32, #tpu.memory_space<vmem>>, %arg5: memref<1x128xf32, #tpu.memory_space<vmem>>, %arg6: memref<8x128xf32, #tpu.memory_space<vmem>>) attributes {dimension_semantics = [#tpu.dimension_semantics<parallel>], iteration_bounds = array<i64: 1>, scalar_prefetch = 0 : i64, scratch_operands = 0 : i64, tpu.core_type = #tpu.core_type<tc>, window_params = [{transform_indices = @transform_0, window_bounds = array<i64: 8, 16>}, {pipeline_mode = #tpu.pipeline_mode<synchronous>, transform_indices = @transform_1, window_bounds = array<i64: 16, 128>}, {pipeline_mode = #tpu.pipeline_mode<synchronous>, transform_indices = @transform_2, window_bounds = array<i64: 1, 128>}, {pipeline_mode = #tpu.pipeline_mode<synchronous>, transform_indices = @transform_3, window_bounds = array<i64: 128, 128>}, {pipeline_mode = #tpu.pipeline_mode<synchronous>, transform_indices = @transform_4, window_bounds = array<i64: 1, 128>}, {transform_indices = @transform_5, window_bounds = array<i64: 8, 128>}]} {
    %c0 = arith.constant 0 : index
    %c0_0 = arith.constant 0 : index
    %0 = vector.load %arg1[%c0, %c0_0] : memref<8x16xf32, #tpu.memory_space<vmem>>, vector<8x16xf32>
    %c0_1 = arith.constant 0 : index
    %c0_2 = arith.constant 0 : index
    %1 = vector.load %arg2[%c0_1, %c0_2] : memref<16x128xf32, #tpu.memory_space<vmem>>, vector<16x128xf32>
    %cst = arith.constant dense<0.000000e+00> : vector<8x128xf32>
    %2 = tpu.matmul %0, %1, %cst {dimension_numbers = #tpu.dot_dimension_numbers<[1], [0], [0], [1], [0, 0, 1, 1], [], []>} : vector<8x16xf32>, vector<16x128xf32>, vector<8x128xf32> -> vector<8x128xf32>
    %c0_3 = arith.constant 0 : index
    %c0_4 = arith.constant 0 : index
    %3 = vector.load %arg3[%c0_3, %c0_4] : memref<1x128xf32, #tpu.memory_space<vmem>>, vector<1x128xf32>
    %4 = vector.broadcast %3 : vector<1x128xf32> to vector<8x128xf32>
    %5 = arith.addf %2, %4 : vector<8x128xf32>
    %cst_5 = arith.constant 0.000000e+00 : f32
    %6 = vector.broadcast %cst_5 : f32 to vector<8x128xf32>
    %7 = arith.maximumf %5, %6 : vector<8x128xf32>
    %c0_6 = arith.constant 0 : index
    %c0_7 = arith.constant 0 : index
    %8 = vector.load %arg4[%c0_6, %c0_7] : memref<128x128xf32, #tpu.memory_space<vmem>>, vector<128x128xf32>
    %cst_8 = arith.constant dense<0.000000e+00> : vector<8x128xf32>
    %9 = tpu.matmul %7, %8, %cst_8 {dimension_numbers = #tpu.dot_dimension_numbers<[1], [0], [0], [1], [0, 0, 1, 1], [], []>} : vector<8x128xf32>, vector<128x128xf32>, vector<8x128xf32> -> vector<8x128xf32>
    %c0_9 = arith.constant 0 : index
    %c0_10 = arith.constant 0 : index
    %10 = vector.load %arg5[%c0_9, %c0_10] : memref<1x128xf32, #tpu.memory_space<vmem>>, vector<1x128xf32>
    %11 = vector.broadcast %10 : vector<1x128xf32> to vector<8x128xf32>
    %12 = arith.addf %9, %11 : vector<8x128xf32>
    %13 = tpu.iota {dimensions = array<i32: 1>} : vector<8x128xi32>
    %c8_i32 = arith.constant 8 : i32
    %14 = vector.broadcast %c8_i32 : i32 to vector<8x128xi32>
    %15 = arith.cmpi slt, %13, %14 : vector<8x128xi32>
    %cst_11 = arith.constant -1.000000e+30 : f32
    %16 = vector.broadcast %cst_11 : f32 to vector<8x128xf32>
    %17 = arith.select %15, %12, %16 : vector<8x128xi1>, vector<8x128xf32>
    %cst_12 = arith.constant dense<0xFF800000> : vector<8xf32>
    %18 = vector.multi_reduction <maximumf>, %17, %cst_12 [1] : vector<8x128xf32> to vector<8xf32>
    %19 = vector.shape_cast %18 : vector<8xf32> to vector<8x1xf32>
    %20 = vector.broadcast %19 : vector<8x1xf32> to vector<8x128xf32>
    %21 = arith.subf %17, %20 : vector<8x128xf32>
    %22 = math.exp %21 : vector<8x128xf32>
    %cst_13 = arith.constant 0.000000e+00 : f32
    %23 = vector.broadcast %cst_13 : f32 to vector<8x128xf32>
    %24 = arith.select %15, %22, %23 : vector<8x128xi1>, vector<8x128xf32>
    %cst_14 = arith.constant dense<0.000000e+00> : vector<8xf32>
    %25 = vector.multi_reduction <add>, %24, %cst_14 [1] : vector<8x128xf32> to vector<8xf32>
    %26 = vector.shape_cast %25 : vector<8xf32> to vector<8x1xf32>
    %27 = tpu.reciprocal %26 : vector<8x1xf32> -> vector<8x1xf32>
    %28 = vector.broadcast %27 : vector<8x1xf32> to vector<8x128xf32>
    %29 = arith.mulf %24, %28 : vector<8x128xf32>
    %30 = arith.select %15, %29, %12 : vector<8x128xi1>, vector<8x128xf32>
    %c0_15 = arith.constant 0 : index
    %c0_16 = arith.constant 0 : index
    %31 = vector.load %arg6[%c0_15, %c0_16] : memref<8x128xf32, #tpu.memory_space<vmem>>, vector<8x128xf32>
    tpu.vector_store %arg6[%c0_15, %c0_16], %30 {strides = array<i32>} : memref<8x128xf32, #tpu.memory_space<vmem>>, vector<8x128xf32>,
    return
  }
  func.func @transform_0(%arg0: i32) -> (i32, i32) {
    %c0_i32 = arith.constant 0 : i32
    %c0_i32_0 = arith.constant 0 : i32
    return %arg0, %c0_i32 : i32, i32
  }
  func.func @transform_1(%arg0: i32) -> (i32, i32) {
    %c0_i32 = arith.constant 0 : i32
    %c0_i32_0 = arith.constant 0 : i32
    %c0_i32_1 = arith.constant 0 : i32
    return %c0_i32, %c0_i32_0 : i32, i32
  }
  func.func @transform_2(%arg0: i32) -> (i32, i32) {
    %c0_i32 = arith.constant 0 : i32
    %c0_i32_0 = arith.constant 0 : i32
    %c0_i32_1 = arith.constant 0 : i32
    return %c0_i32, %c0_i32_0 : i32, i32
  }
  func.func @transform_3(%arg0: i32) -> (i32, i32) {
    %c0_i32 = arith.constant 0 : i32
    %c0_i32_0 = arith.constant 0 : i32
    %c0_i32_1 = arith.constant 0 : i32
    return %c0_i32, %c0_i32_0 : i32, i32
  }
  func.func @transform_4(%arg0: i32) -> (i32, i32) {
    %c0_i32 = arith.constant 0 : i32
    %c0_i32_0 = arith.constant 0 : i32
    %c0_i32_1 = arith.constant 0 : i32
    return %c0_i32, %c0_i32_0 : i32, i32
  }
  func.func @transform_5(%arg0: i32) -> (i32, i32) {
    %c0_i32 = arith.constant 0 : i32
    %c0_i32_0 = arith.constant 0 : i32
    return %arg0, %c0_i32 : i32, i32
  }
}

</mosaic_0001>

<llo_original>
// kernel: actor_critic_forward.1
$region0: #{actor_critic_forward.1}
  #allocation0 [shape = 'u32[]', space=smem, size = 0x4, offset = 0x4, fixed_abs, tag = 'smem constant byte address 0x4 - core index']
  #allocation1 [shape = 'u32[72,128]{1,0:T(1,128)}', space=vmem, size = 0x9000, scoped, tag = 'internal scratch']
  %s0 = inlined_call_operand.vmem [shape: f32[8,16], index: 0, kind: input, shape index: {}]
  %s1 = inlined_call_operand.hbm [shape: f32[16,128], index: 1, kind: input, shape index: {}]
  %s2 = inlined_call_operand.vmem [shape: f32[1,128], index: 2, kind: input, shape index: {}]
  %s3 = inlined_call_operand.hbm [shape: f32[128,128], index: 3, kind: input, shape index: {}]
  %s4 = inlined_call_operand.vmem [shape: f32[1,128], index: 4, kind: input, shape index: {}]
  %s5 = inlined_call_operand.vmem [shape: f32[8,128], index: 5, kind: output, shape index: {}]
  %s6 = sld [smem:[#allocation0]]
  $region38: #{actor_critic_forward.1} parent=0
    _
  %s8 = ssub.s32 1, %s6
  %s9 = scalar_select 0, %s8, %s6
  $region1: #{actor_critic_forward.1} parent=0
    #allocation2 [shape = 'u8[8192]{0}', space=vmem, size = 0x2000, scoped, tag = 'input window, operand 1, single buffered']
    #allocation3 [shape = 's32[1]{0}', space=sflag, size = 0x4, scoped, tag = 'scoped memory for actor_critic_forward.1']
    #allocation4 [shape = 'u8[65536]{0}', space=vmem, size = 0x10000, scoped, tag = 'input window, operand 3, single buffered']
    #allocation5 [shape = 's32[1]{0}', space=sflag, size = 0x4, scoped, tag = 'scoped memory for actor_critic_forward.1']
    %10 = vsyncpa [#allocation3], 0
    %11 = vsyncpa [#allocation5], 0
    // Predicated region
    $region2: #{actor_critic_forward.1} parent=1 // pred_check
      _
    $region3: #{actor_critic_forward.1} parent=1 // pred_check_branch
      %13 = sbr.rel (0) target = $region5
    $region4: #{actor_critic_forward.1} parent=1 // pred_region
      _
    $region5: #{actor_critic_forward.1} parent=1 // pred_fallthru
      _
    // Predicated region
    $region6: #{actor_critic_forward.1} parent=1 // pred_check
      _
    $region7: #{actor_critic_forward.1} parent=1 // pred_check_branch
      %15 = sbr.rel (0) target = $region9
    $region8: #{actor_critic_forward.1} parent=1 // pred_region
      %17 = vsyncadd [#allocation3], 0
      %s18 = sshll.u32 %s1, 4
      %s19 = int_to_ptr.hbm [resolvable:$true] %s18
      %s20 = sshll.u32 [#allocation2], 4
      %s21 = int_to_ptr.vmem [resolvable:$true] %s20
      %26 = dma.hbm_to_vmem [thread:$0]  %s19, 256, %s21, [#allocation3], 128, 128, 8
    $region9: #{actor_critic_forward.1} parent=1 // pred_fallthru
      _
    // Predicated region
    $region10: #{actor_critic_forward.1} parent=1 // pred_check
      _
    $region11: #{actor_critic_forward.1} parent=1 // pred_check_branch
      %28 = sbr.rel (0) target = $region13
    $region12: #{actor_critic_forward.1} parent=1 // pred_region
      _
    $region13: #{actor_critic_forward.1} parent=1 // pred_fallthru
      _
    // Predicated region
    $region14: #{actor_critic_forward.1} parent=1 // pred_check
      _
    $region15: #{actor_critic_forward.1} parent=1 // pred_check_branch
      %30 = sbr.rel (0) target = $region17
    $region16: #{actor_critic_forward.1} parent=1 // pred_region
      %32 = vsyncadd [#allocation5], 0
      %s33 = sshll.u32 %s3, 4
      %s34 = int_to_ptr.hbm [resolvable:$true] %s33
      %s35 = sshll.u32 [#allocation4], 4
      %s36 = int_to_ptr.vmem [resolvable:$true] %s35
      %41 = dma.hbm_to_vmem [thread:$0]  %s34, 2048, %s36, [#allocation5], 128, 128, 8
    $region17: #{actor_critic_forward.1} parent=1 // pred_fallthru
      _
    // Predicated region
    $region18: #{actor_critic_forward.1} parent=1 // pred_check
      _
    $region19: #{actor_critic_forward.1} parent=1 // pred_check_branch
      %43 = sbr.rel (0) target = $region21
    $region20: #{actor_critic_forward.1} parent=1 // pred_region
      _
    $region21: #{actor_critic_forward.1} parent=1 // pred_fallthru
      _
    // Predicated region
    $region22: #{actor_critic_forward.1} parent=1 // pred_check
      _
    $region23: #{actor_critic_forward.1} parent=1 // pred_check_branch
      %45 = sbr.rel (0) target = $region25
    $region24: #{actor_critic_forward.1} parent=1 // pred_region
      %47 = dma.done [#allocation3], 256
    $region25: #{actor_critic_forward.1} parent=1 // pred_fallthru
      _
    // Predicated region
    $region26: #{actor_critic_forward.1} parent=1 // pred_check
      _
    $region27: #{actor_critic_forward.1} parent=1 // pred_check_branch
      %49 = sbr.rel (0) target = $region29
    $region28: #{actor_critic_forward.1} parent=1 // pred_region
      %51 = dma.done [#allocation5], 2048
    $region29: #{actor_critic_forward.1} parent=1 // pred_fallthru
      _
    %v52 = vld [vmem:[%s0] sm:$0xff]
    %v53 = vld [vmem:[#allocation2] sm:$0xff]
    %v54 = vld [vmem:[#allocation2 + $0x8] sm:$0xff]
    %v55 = vld [vmem:[%s2] sm:$0x1]
    %v57 = vperm.slane %v55, 0
    %vm59 = vcmask 130048
    %v61 = vsel %vm59, %v52, 0
    %63 = vmatpush.msra.mxu0 0.0
    %64 = vmatpush.msra.mxu0 0.0
    %65 = vmatpush.msra.mxu0 0.0
    %66 = vmatpush.msra.mxu0 0.0
    %67 = vmatpush.msra.mxu0 0.0
    %68 = vmatpush.msra.mxu0 0.0
    %69 = vmatpush.msra.mxu0 0.0
    %70 = vmatpush.msra.mxu0 0.0
    %71 = vmatpush.msra.mxu0 0.0
    %72 = vmatpush.msra.mxu0 0.0
    %73 = vmatpush.msra.mxu0 0.0
    %74 = vmatpush.msra.mxu0 0.0
    %75 = vmatpush.msra.mxu0 0.0
    %76 = vmatpush.msra.mxu0 0.0
    %77 = vmatpush.msra.mxu0 %v54
    %78 = vmatpush.msra.mxu0 %v53
    %79 = vmatmul.f32.gmra.mxu0 %v61
    %v80 = vpop.f32.mrf.mxu0
    %v81 = vadd.f32 %v57, %v80
    %82 = vdwg.mxu0
    %v83 = vmax.f32 %v81, 0.0
    %v84 = vld [vmem:[#allocation4] sm:$0xff]
    %v85 = vld [vmem:[#allocation4 + $0x8] sm:$0xff]
    %v86 = vld [vmem:[#allocation4 + $0x10] sm:$0xff]
    %v87 = vld [vmem:[#allocation4 + $0x18] sm:$0xff]
    %v88 = vld [vmem:[#allocation4 + $0x20] sm:$0xff]
    %v89 = vld [vmem:[#allocation4 + $0x28] sm:$0xff]
    %v90 = vld [vmem:[#allocation4 + $0x30] sm:$0xff]
    %v91 = vld [vmem:[#allocation4 + $0x38] sm:$0xff]
    %v92 = vld [vmem:[#allocation4 + $0x40] sm:$0xff]
    %v93 = vld [vmem:[#allocation4 + $0x48] sm:$0xff]
    %v94 = vld [vmem:[#allocation4 + $0x50] sm:$0xff]
    %v95 = vld [vmem:[#allocation4 + $0x58] sm:$0xff]
    %v96 = vld [vmem:[#allocation4 + $0x60] sm:$0xff]
    %v97 = vld [vmem:[#allocation4 + $0x68] sm:$0xff]
    %v98 = vld [vmem:[#allocation4 + $0x70] sm:$0xff]
    %v99 = vld [vmem:[#allocation4 + $0x78] sm:$0xff]
    %v100 = vld [vmem:[%s4] sm:$0x1]
    %v102 = vperm.slane %v100, 0
    %104 = vmatpush.msra.mxu0 %v99
    %105 = vmatpush.msra.mxu0 %v98
    %106 = vmatpush.msra.mxu0 %v97
    %107 = vmatpush.msra.mxu0 %v96
    %108 = vmatpush.msra.mxu0 %v95
    %109 = vmatpush.msra.mxu0 %v94
    %110 = vmatpush.msra.mxu0 %v93
    %111 = vmatpush.msra.mxu0 %v92
    %112 = vmatpush.msra.mxu0 %v91
    %113 = vmatpush.msra.mxu0 %v90
    %114 = vmatpush.msra.mxu0 %v89
    %115 = vmatpush.msra.mxu0 %v88
    %116 = vmatpush.msra.mxu0 %v87
    %117 = vmatpush.msra.mxu0 %v86
    %118 = vmatpush.msra.mxu0 %v85
    %119 = vmatpush.msra.mxu0 %v84
    %120 = vmatmul.f32.gmra.mxu0 %v83
    %v121 = vpop.f32.mrf.mxu0
    %v122 = vadd.f32 %v102, %v121
    %123 = vdwg.mxu0
    %v124 = vlaneseq
    %v125 = vand.u32 %v124, 127
    %vm126 = vcmp.lt.s32.totalorder %v125, 8
    %v127 = vsel %vm126, %v122, -1e+30
    %128 = vmax.xlane.f32.xlu0 %v127
    %v129 = vpop.xlane.xlu0 %128
    %v130 = vsub.f32 %v127, %v129
    %v131 = vmul.f32 %v130, 1.442695
    %v132 = vpow.pop %v131
    %v133 = vsel %vm126, %v132, 0.0
    %134 = vadd.xlane.f32.xlu0 %v133
    %v135 = vpop.xlane.xlu0 %134
    %v136 = vrcp.pop %v135
    %v137 = vmul.f32 %v135, %v136
    %v138 = vsub.f32 1.0, %v137
    %v139 = vmul.f32 %v136, %v138
    %v140 = vadd.f32 %v136, %v139
    %vm141 = vweird.f32 %v135
    %vm142 = vweird.f32 %v136
    %vm143 = vmor %vm141, %vm142
    %v144 = vsel %vm143, %v136, %v140
    %v145 = vand.u32 2147483647, %v135
    %vm146 = vcmp.eq.f32.partialorder %v145, 8.507059e+37
    %v147 = vand.u32 %v135, 2147483648
    %v148 = vor.u32 1.1754944e-38, %v147
    %v149 = vsel %vm146, %v148, %v144
    %v150 = vmul.f32 %v133, %v149
    %v151 = vsel %vm126, %v150, %v122
    %152 = vst [vmem:[%s5] sm:$0xff] %v151
    // Predicated region
    $region30: #{actor_critic_forward.1} parent=1 // pred_check
      _
    $region31: #{actor_critic_forward.1} parent=1 // pred_check_branch
      %154 = sbr.rel (0) target = $region33
    $region32: #{actor_critic_forward.1} parent=1 // pred_region
      _
    $region33: #{actor_critic_forward.1} parent=1 // pred_fallthru
      _
    // Predicated region
    $region34: #{actor_critic_forward.1} parent=1 // pred_check
      _
    $region35: #{actor_critic_forward.1} parent=1 // pred_check_branch
      %156 = sbr.rel (0) target = $region37
    $region36: #{actor_critic_forward.1} parent=1 // pred_region
      _
    $region37: #{actor_critic_forward.1} parent=1 // pred_fallthru
      _
    %157 = vsyncpa [#allocation3], 1
    %158 = vsyncpa [#allocation5], 1

</llo_original>
